<compile_context>
chip_gen: v5e
topology: v5e:2x2
jax: 0.10.0
libtpu: 0.0.40
codegen_flags: <defaults>
</compile_context>

<pallas_src>
import jax
import jax.numpy as jnp
from jax.experimental import pallas as pl
from jax.experimental.pallas import tpu as pltpu

LANE = 128


# ----------------------------------------------------------------------------
# Kernels
# ----------------------------------------------------------------------------
def mlp_kernel(x_ref, w1_ref, b1_ref, w2_ref, b2_ref, w3_ref, b3_ref, o_ref):
    """Fully fused path: all three layers per batch tile, weights resident."""
    h = jnp.dot(x_ref[...], w1_ref[...], preferred_element_type=jnp.float32)
    h = jnp.maximum(h + b1_ref[...], 0.0)
    h = jnp.dot(h.astype(w2_ref.dtype), w2_ref[...],
                preferred_element_type=jnp.float32)
    h = jnp.maximum(h + b2_ref[...], 0.0)
    out = jnp.dot(h.astype(w3_ref.dtype), w3_ref[...],
                  preferred_element_type=jnp.float32) + b3_ref[...]
    o_ref[...] = out.astype(o_ref.dtype)


def mlp_kernel_ktiled(x_ref, w1_ref, b1_ref, w2_ref, b2_ref, w3_ref, b3_ref,
                      o_ref, acc_ref):
    """Large-input fallback: layer-1 K dim is a grid axis; w1 K-slabs are
    streamed (double-buffered) into an f32 accumulator; layers 2/3 + store
    happen on the last K step."""
    k = pl.program_id(1)

    @pl.when(k == 0)
    def _():
        acc_ref[...] = jnp.zeros_like(acc_ref)

    acc_ref[...] += jnp.dot(x_ref[...], w1_ref[...],
                            preferred_element_type=jnp.float32)

    @pl.when(k == pl.num_programs(1) - 1)
    def _():
        h = jnp.maximum(acc_ref[...] + b1_ref[...], 0.0)
        h = jnp.dot(h.astype(w2_ref.dtype), w2_ref[...],
                    preferred_element_type=jnp.float32)
        h = jnp.maximum(h + b2_ref[...], 0.0)
        out = jnp.dot(h.astype(w3_ref.dtype), w3_ref[...],
                      preferred_element_type=jnp.float32) + b3_ref[...]
        o_ref[...] = out.astype(o_ref.dtype)


# ----------------------------------------------------------------------------
# Small helpers
# ----------------------------------------------------------------------------
def _round_up(n, m):
    return ((n + m - 1) // m) * m


def _cdiv(n, m):
    return (n + m - 1) // m


def _sublane_pack(dtype):
    # Rows per packed vreg sublane group: 8 for f32, 16 for bf16, 32 for 8-bit.
    return max(8, 32 // jnp.dtype(dtype).itemsize)


def _pad_cast(a, rows, cols, dtype):
    dtype = jnp.dtype(dtype)
    r, c = a.shape
    out = a if a.dtype == dtype else a.astype(dtype)
    if r != rows or c != cols:
        out = jnp.pad(out, ((0, rows - r), (0, cols - c)))
    return out


def _device_kind():
    try:
        return jax.devices()[0].device_kind.lower()
    except Exception:
        return ""


def _is_v7x():
    kind = _device_kind()
    return ("v7" in kind) or ("tpu7" in kind)


def _vmem_capacity_bytes():
    return (64 if _is_v7x() else 128) * 1024 * 1024


# ----------------------------------------------------------------------------
# One-time parameter preparation (hoisted out of the forward pass)
# ----------------------------------------------------------------------------
def prepare_params(params, *, compute_dtype=jnp.bfloat16):
    """Pad feature dims to lane (128) multiples and cast weights to the MXU
    compute dtype ONCE.  Zero padding is exact: padded weight rows/cols and
    biases are zero, padded hidden columns stay 0 through ReLU and contribute
    nothing downstream.  Biases stay f32 (added to the f32 accumulator, so the
    path is v5e-safe).  bf16 is the default fast path on v5e/v6e/v7x.
    # TODO(synk): optional 8-bit weight quantization (int8 on v5e/v6e, fp8 on
    # v7x) would halve weight bytes again on the weight-BW-bound small-batch
    # regime; not implemented here.
    """
    w1, w2, w3 = params["w1"], params["w2"], params["w3"]
    b1, b2, b3 = params["b1"], params["b2"], params["b3"]
    K, H = w1.shape
    C = w3.shape[1]
    K_pad, H_pad, C_pad = (_round_up(d, LANE) for d in (K, H, C))

    prepped = {
        "w1": _pad_cast(w1, K_pad, H_pad, compute_dtype),
        "w2": _pad_cast(w2, H_pad, H_pad, compute_dtype),
        "w3": _pad_cast(w3, H_pad, C_pad, compute_dtype),
        "b1": _pad_cast(b1, 1, H_pad, jnp.float32),
        "b2": _pad_cast(b2, 1, H_pad, jnp.float32),
        "b3": _pad_cast(b3, 1, C_pad, jnp.float32),
    }
    meta = {
        "K": K, "H": H, "C": C,
        "K_pad": K_pad, "H_pad": H_pad, "C_pad": C_pad,
        "compute_dtype": jnp.dtype(compute_dtype),
    }
    return prepped, meta


# ----------------------------------------------------------------------------
# Forward pass
# ----------------------------------------------------------------------------
def neural_net_forward(x, prepped, meta, *, out_dtype=None, tm_max=None,
                       k_tiling=None, tk=None):
    """Forward of the 3-layer MLP on pre-padded params (see prepare_params).

    x:         (B, input_size)
    out_dtype: output dtype; defaults to the compute dtype (bf16 on the fast
               path -> lane-dense bf16 stores).  Note the bf16 path quantizes
               the *inputs* (x and weights) to bf16; accumulation stays f32.
    k_tiling:  None = auto (stream w1 over K when resident w1 won't fit VMEM),
               True/False to force.
    """
    w1, b1 = prepped["w1"], prepped["b1"]
    w2, b2 = prepped["w2"], prepped["b2"]
    w3, b3 = prepped["w3"], prepped["b3"]
    cdt = meta["compute_dtype"]
    K, C = meta["K"], meta["C"]
    K_pad, H_pad, C_pad = meta["K_pad"], meta["H_pad"], meta["C_pad"]

    B = x.shape[0]
    assert x.shape[1] == K, "input feature size mismatch"

    odt = jnp.dtype(out_dtype) if out_dtype is not None else cdt
    w_item = cdt.itemsize
    o_item = odt.itemsize
    sub = _sublane_pack(cdt)

    vmem_cap = _vmem_capacity_bytes()
    vmem_budget = int(vmem_cap * 0.75)           # headroom for compiler scratch

    # ---- fused vs. K-tiled decision --------------------------------------
    resident_w_bytes = (K_pad * H_pad + H_pad * H_pad + H_pad * C_pad) * w_item
    bias_bytes = (2 * H_pad + C_pad) * 4
    per_row_fused = (2 * K_pad * w_item          # x tile, double-buffered
                     + 2 * C_pad * o_item        # out tile, double-buffered
                     + 3 * H_pad * 4 + C_pad * 4)  # f32 intermediates
    fused_tm_budget = (vmem_budget - resident_w_bytes - bias_bytes) // per_row_fused
    if k_tiling is None:
        k_tiling = fused_tm_budget < sub

    if not k_tiling:
        weight_fixed = resident_w_bytes + bias_bytes
        per_row = per_row_fused
    else:
        # Stream w1 in (tk, H_pad) slabs; w2/w3/biases stay resident.
        tk_eff = tk if tk is not None else min(K_pad, 512)
        tk_eff = max(LANE, (min(tk_eff, K_pad) // LANE) * LANE)
        while K_pad % tk_eff != 0:               # tk must divide K_pad exactly
            tk_eff -= LANE
        tk = tk_eff
        weight_fixed = ((H_pad * H_pad + H_pad * C_pad) * w_item + bias_bytes
                        + 2 * tk * H_pad * w_item)       # double-buffered w1
        per_row = (2 * tk * w_item + 2 * C_pad * o_item
                   + H_pad * 4                            # f32 acc scratch
                   + 3 * H_pad * 4 + C_pad * 4)
        # TODO(synk): if even one (tk=128, H_pad) w1 slab + resident w2/w3
        # exceeds VMEM (enormous hidden_size), layer 2/3 would also need tiling.

    # ---- batch tile (TM) ---------------------------------------------------
    tm_cap = tm_max if tm_max is not None else (256 if _is_v7x() else 512)
    tm_budget = max((vmem_budget - weight_fixed) // per_row, 0)
    TM = min(tm_cap, tm_budget, _round_up(B, sub))
    if TM >= 256:
        TM = (TM // 256) * 256                   # v6e MXU prefers M % 256 == 0
    else:
        TM = max(sub, (TM // sub) * sub)         # full packed-sublane tiles
    # Megacore: ensure >=2 batch grid steps when B allows it (v7x has 2 TCs).
    if _cdiv(B, TM) < 2 and B > sub:
        TM = _round_up(_cdiv(B, 2), sub)

    B_pad = _round_up(B, TM)
    grid_m = B_pad // TM

    # ---- activations: single fused pad+cast (skipped entirely if a no-op).
    # Padded tail rows are zeros -> harmless, sliced off below.
    if (B_pad, K_pad) != (B, K) or x.dtype != cdt:
        x_p = jnp.pad(x, ((0, B_pad - B), (0, K_pad - K))).astype(cdt)
    else:
        x_p = x

    # ---- specs -------------------------------------------------------------
    est_vmem = weight_fixed + TM * per_row
    vmem_limit = int(min(vmem_cap * 0.9,
                         max(32 * 1024 * 1024, est_vmem * 1.3)))

    flops = 2 * B_pad * (K_pad * H_pad + H_pad * H_pad + H_pad * C_pad)
    bytes_accessed = int(
        x_p.size * x_p.dtype.itemsize
        + sum(a.size * a.dtype.itemsize for a in (w1, b1, w2, b2, w3, b3))
        + B_pad * C_pad * o_item)
    cost = pl.CostEstimate(flops=flops, transcendentals=0,
                           bytes_accessed=bytes_accessed)

    if not k_tiling:
        # Constant index_map -> single-buffered resident weights/biases.
        resident = lambda shape: pl.BlockSpec(
            shape, lambda i: (0, 0), pipeline_mode=pl.Buffered(1))
        grid = (grid_m,)
        in_specs = [
            pl.BlockSpec((TM, K_pad), lambda i: (i, 0)),     # x: batch-tiled
            resident(w1.shape), resident(b1.shape),
            resident(w2.shape), resident(b2.shape),
            resident(w3.shape), resident(b3.shape),
        ]
        out_specs = pl.BlockSpec((TM, C_pad), lambda i: (i, 0))   # lane-dense
        kernel = mlp_kernel
        scratch = ()
        dims = ("parallel",)
    else:
        resident = lambda shape: pl.BlockSpec(
            shape, lambda i, k: (0, 0), pipeline_mode=pl.Buffered(1))
        grid = (grid_m, K_pad // tk)             # reduction (K) axis last
        in_specs = [
            pl.BlockSpec((TM, tk), lambda i, k: (i, k)),     # x: batch+K tiled
            pl.BlockSpec((tk, H_pad), lambda i, k: (k, 0)),  # w1: streamed
            resident(b1.shape),
            resident(w2.shape), resident(b2.shape),
            resident(w3.shape), resident(b3.shape),
        ]
        out_specs = pl.BlockSpec((TM, C_pad), lambda i, k: (i, 0))
        kernel = mlp_kernel_ktiled
        scratch = (pltpu.VMEM((TM, H_pad), jnp.float32),)
        dims = ("parallel", "arbitrary")

    out_pad = pl.pallas_call(
        kernel,
        out_shape=jax.ShapeDtypeStruct((B_pad, C_pad), odt),
        grid=grid,
        in_specs=in_specs,
        out_specs=out_specs,
        scratch_shapes=scratch,
        compiler_params=pltpu.CompilerParams(
            dimension_semantics=dims,
            vmem_limit_bytes=vmem_limit),
        cost_estimate=cost,
    )(x_p, w1, b1, w2, b2, w3, b3)

    # Cheap XLA slice to drop lane/batch padding.
    return out_pad[:B, :C]


# ----------------------------------------------------------------------------
# Init mimicking torch.nn.Linear's U(-1/sqrt(fan_in), 1/sqrt(fan_in))
# ----------------------------------------------------------------------------
def init_params(key, input_size, hidden_size, num_classes, dtype=jnp.float32):
    ks = jax.random.split(key, 6)

    def linear(kw, kb, fan_in, fan_out):
        bound = 1.0 / jnp.sqrt(fan_in)
        w = jax.random.uniform(kw, (fan_in, fan_out), dtype, -bound, bound)
        b = jax.random.uniform(kb, (1, fan_out), dtype, -bound, bound)
        return w, b

    w1, b1 = linear(ks[0], ks[1], input_size, hidden_size)
    w2, b2 = linear(ks[2], ks[3], hidden_size, hidden_size)
    w3, b3 = linear(ks[4], ks[5], hidden_size, num_classes)
    return {"w1": w1, "b1": b1, "w2": w2, "b2": b2, "w3": w3, "b3": b3}


if __name__ == "__main__":
    key = jax.random.PRNGKey(0)
    kx, kp, kx2, kp2, kx3 = jax.random.split(key, 5)

    batch, input_size, hidden_size, num_classes = 8, 32, 32, 16

    x = jax.random.normal(kx, (batch, input_size), dtype=jnp.float32)
    params = init_params(kp, input_size, hidden_size, num_classes)

    # Pure-JAX reference (same math as the PyTorch forward).
    def ref(xv, p):
        h = jnp.maximum(xv @ p["w1"] + p["b1"], 0.0)
        h = jnp.maximum(h @ p["w2"] + p["b2"], 0.0)
        return h @ p["w3"] + p["b3"]

    expected = ref(x, params)

    # 1) Default fast path: bf16 MXU inputs / f32 accumulate, bf16 output.
    prepped_bf16, meta_bf16 = prepare_params(params)   # bf16 default, all gens
    out = jax.block_until_ready(neural_net_forward(x, prepped_bf16, meta_bf16))
    assert out.shape == (batch, num_classes)
    assert out.dtype == jnp.bfloat16
    assert jnp.allclose(out.astype(jnp.float32), expected, atol=2e-1, rtol=2e-1)

    # 2) f32 debug/accuracy path (exact PyTorch-module semantics).
    prepped_f32, meta_f32 = prepare_params(params, compute_dtype=jnp.float32)
    out_f32 = jax.block_until_ready(
        neural_net_forward(x, prepped_f32, meta_f32, out_dtype=jnp.float32))
    assert jnp.allclose(out_f32, expected, atol=1e-4, rtol=1e-4)

    # 3) Larger batch -> multi-step batch grid (both TCs on v7x), bf16 path.
    xb = jax.random.normal(kx2, (64, input_size), dtype=jnp.float32)
    out_b = jax.block_until_ready(
        neural_net_forward(xb, prepped_bf16, meta_bf16))
    assert jnp.allclose(out_b.astype(jnp.float32), ref(xb, params),
                        atol=2e-1, rtol=2e-1)

    # 4) K-tiled fallback (streams w1 over the K grid axis), forced on a wider
    #    input so multiple K accumulation steps actually run.
    params_wide = init_params(kp2, 300, hidden_size, num_classes)
    xw = jax.random.normal(kx3, (16, 300), dtype=jnp.float32)
    prepped_w, meta_w = prepare_params(params_wide, compute_dtype=jnp.float32)
    out_w = jax.block_until_ready(
        neural_net_forward(xw, prepped_w, meta_w, out_dtype=jnp.float32,
                           k_tiling=True, tk=128))
    assert jnp.allclose(out_w, ref(xw, params_wide), atol=1e-4, rtol=1e-4)

    print("KERNEL_OK")
</pallas_src>

<mosaic_0001>
module attributes {stable_mosaic.version = 11 : i64} {
  func.func @mlp_kernel(%arg0: i32, %arg1: memref<16x128xbf16, #tpu.memory_space<vmem>>, %arg2: memref<128x128xbf16, #tpu.memory_space<vmem>>, %arg3: memref<1x128xf32, #tpu.memory_space<vmem>>, %arg4: memref<128x128xbf16, #tpu.memory_space<vmem>>, %arg5: memref<1x128xf32, #tpu.memory_space<vmem>>, %arg6: memref<128x128xbf16, #tpu.memory_space<vmem>>, %arg7: memref<1x128xf32, #tpu.memory_space<vmem>>, %arg8: memref<16x128xbf16, #tpu.memory_space<vmem>>) attributes {dimension_semantics = [#tpu.dimension_semantics<parallel>], iteration_bounds = array<i64: 1>, scalar_prefetch = 0 : i64, scratch_operands = 0 : i64, tpu.core_type = #tpu.core_type<tc>, window_params = [{transform_indices = @transform_0, window_bounds = array<i64: 16, 128>}, {pipeline_mode = #tpu.pipeline_mode<synchronous>, transform_indices = @transform_1, window_bounds = array<i64: 128, 128>}, {pipeline_mode = #tpu.pipeline_mode<synchronous>, transform_indices = @transform_2, window_bounds = array<i64: 1, 128>}, {pipeline_mode = #tpu.pipeline_mode<synchronous>, transform_indices = @transform_3, window_bounds = array<i64: 128, 128>}, {pipeline_mode = #tpu.pipeline_mode<synchronous>, transform_indices = @transform_4, window_bounds = array<i64: 1, 128>}, {pipeline_mode = #tpu.pipeline_mode<synchronous>, transform_indices = @transform_5, window_bounds = array<i64: 128, 128>}, {pipeline_mode = #tpu.pipeline_mode<synchronous>, transform_indices = @transform_6, window_bounds = array<i64: 1, 128>}, {transform_indices = @transform_7, window_bounds = array<i64: 16, 128>}]} {
    %c0 = arith.constant 0 : index
    %c0_0 = arith.constant 0 : index
    %0 = vector.load %arg1[%c0, %c0_0] : memref<16x128xbf16, #tpu.memory_space<vmem>>, vector<16x128xbf16>
    %c0_1 = arith.constant 0 : index
    %c0_2 = arith.constant 0 : index
    %1 = vector.load %arg2[%c0_1, %c0_2] : memref<128x128xbf16, #tpu.memory_space<vmem>>, vector<128x128xbf16>
    %cst = arith.constant dense<0.000000e+00> : vector<16x128xf32>
    %2 = tpu.matmul %0, %1, %cst {dimension_numbers = #tpu.dot_dimension_numbers<[1], [0], [0], [1], [0, 0, 1, 1], [], []>} : vector<16x128xbf16>, vector<128x128xbf16>, vector<16x128xf32> -> vector<16x128xf32>
    %c0_3 = arith.constant 0 : index
    %c0_4 = arith.constant 0 : index
    %3 = vector.load %arg3[%c0_3, %c0_4] : memref<1x128xf32, #tpu.memory_space<vmem>>, vector<1x128xf32>
    %4 = vector.broadcast %3 : vector<1x128xf32> to vector<16x128xf32>
    %5 = arith.addf %2, %4 : vector<16x128xf32>
    %cst_5 = arith.constant 0.000000e+00 : f32
    %6 = vector.broadcast %cst_5 : f32 to vector<16x128xf32>
    %7 = arith.maximumf %5, %6 : vector<16x128xf32>
    %8 = arith.truncf %7 : vector<16x128xf32> to vector<16x128xbf16>
    %c0_6 = arith.constant 0 : index
    %c0_7 = arith.constant 0 : index
    %9 = vector.load %arg4[%c0_6, %c0_7] : memref<128x128xbf16, #tpu.memory_space<vmem>>, vector<128x128xbf16>
    %cst_8 = arith.constant dense<0.000000e+00> : vector<16x128xf32>
    %10 = tpu.matmul %8, %9, %cst_8 {dimension_numbers = #tpu.dot_dimension_numbers<[1], [0], [0], [1], [0, 0, 1, 1], [], []>} : vector<16x128xbf16>, vector<128x128xbf16>, vector<16x128xf32> -> vector<16x128xf32>
    %c0_9 = arith.constant 0 : index
    %c0_10 = arith.constant 0 : index
    %11 = vector.load %arg5[%c0_9, %c0_10] : memref<1x128xf32, #tpu.memory_space<vmem>>, vector<1x128xf32>
    %12 = vector.broadcast %11 : vector<1x128xf32> to vector<16x128xf32>
    %13 = arith.addf %10, %12 : vector<16x128xf32>
    %cst_11 = arith.constant 0.000000e+00 : f32
    %14 = vector.broadcast %cst_11 : f32 to vector<16x128xf32>
    %15 = arith.maximumf %13, %14 : vector<16x128xf32>
    %16 = arith.truncf %15 : vector<16x128xf32> to vector<16x128xbf16>
    %c0_12 = arith.constant 0 : index
    %c0_13 = arith.constant 0 : index
    %17 = vector.load %arg6[%c0_12, %c0_13] : memref<128x128xbf16, #tpu.memory_space<vmem>>, vector<128x128xbf16>
    %cst_14 = arith.constant dense<0.000000e+00> : vector<16x128xf32>
    %18 = tpu.matmul %16, %17, %cst_14 {dimension_numbers = #tpu.dot_dimension_numbers<[1], [0], [0], [1], [0, 0, 1, 1], [], []>} : vector<16x128xbf16>, vector<128x128xbf16>, vector<16x128xf32> -> vector<16x128xf32>
    %c0_15 = arith.constant 0 : index
    %c0_16 = arith.constant 0 : index
    %19 = vector.load %arg7[%c0_15, %c0_16] : memref<1x128xf32, #tpu.memory_space<vmem>>, vector<1x128xf32>
    %20 = vector.broadcast %19 : vector<1x128xf32> to vector<16x128xf32>
    %21 = arith.addf %18, %20 : vector<16x128xf32>
    %22 = arith.truncf %21 : vector<16x128xf32> to vector<16x128xbf16>
    %c0_17 = arith.constant 0 : index
    %c0_18 = arith.constant 0 : index
    %23 = vector.load %arg8[%c0_17, %c0_18] : memref<16x128xbf16, #tpu.memory_space<vmem>>, vector<16x128xbf16>
    tpu.vector_store %arg8[%c0_17, %c0_18], %22 {strides = array<i32>} : memref<16x128xbf16, #tpu.memory_space<vmem>>, vector<16x128xbf16>,
    return
  }
  func.func @transform_0(%arg0: i32) -> (i32, i32) {
    %c0_i32 = arith.constant 0 : i32
    %c0_i32_0 = arith.constant 0 : i32
    return %arg0, %c0_i32 : i32, i32
  }
  func.func @transform_1(%arg0: i32) -> (i32, i32) {
    %c0_i32 = arith.constant 0 : i32
    %c0_i32_0 = arith.constant 0 : i32
    %c0_i32_1 = arith.constant 0 : i32
    return %c0_i32, %c0_i32_0 : i32, i32
  }
  func.func @transform_2(%arg0: i32) -> (i32, i32) {
    %c0_i32 = arith.constant 0 : i32
    %c0_i32_0 = arith.constant 0 : i32
    %c0_i32_1 = arith.constant 0 : i32
    return %c0_i32, %c0_i32_0 : i32, i32
  }
  func.func @transform_3(%arg0: i32) -> (i32, i32) {
    %c0_i32 = arith.constant 0 : i32
    %c0_i32_0 = arith.constant 0 : i32
    %c0_i32_1 = arith.constant 0 : i32
    return %c0_i32, %c0_i32_0 : i32, i32
  }
  func.func @transform_4(%arg0: i32) -> (i32, i32) {
    %c0_i32 = arith.constant 0 : i32
    %c0_i32_0 = arith.constant 0 : i32
    %c0_i32_1 = arith.constant 0 : i32
    return %c0_i32, %c0_i32_0 : i32, i32
  }
  func.func @transform_5(%arg0: i32) -> (i32, i32) {
    %c0_i32 = arith.constant 0 : i32
    %c0_i32_0 = arith.constant 0 : i32
    %c0_i32_1 = arith.constant 0 : i32
    return %c0_i32, %c0_i32_0 : i32, i32
  }
  func.func @transform_6(%arg0: i32) -> (i32, i32) {
    %c0_i32 = arith.constant 0 : i32
    %c0_i32_0 = arith.constant 0 : i32
    %c0_i32_1 = arith.constant 0 : i32
    return %c0_i32, %c0_i32_0 : i32, i32
  }
  func.func @transform_7(%arg0: i32) -> (i32, i32) {
    %c0_i32 = arith.constant 0 : i32
    %c0_i32_0 = arith.constant 0 : i32
    return %arg0, %c0_i32 : i32, i32
  }
}

</mosaic_0001>

<llo_original>
// kernel: tpu_custom_call.1
$region0: #{tpu_custom_call.1}
  #allocation0 [shape = 'u32[]', space=smem, size = 0x4, offset = 0x4, fixed_abs, tag = 'smem constant byte address 0x4 - core index']
  #allocation1 [shape = 'u32[72,128]{1,0:T(1,128)}', space=vmem, size = 0x9000, scoped, tag = 'internal scratch']
  %s0 = inlined_call_operand.hbm [shape: bf16[16,128], index: 0, kind: input, shape index: {}]
  %s1 = inlined_call_operand.hbm [shape: bf16[128,128], index: 1, kind: input, shape index: {}]
  %s2 = inlined_call_operand.vmem [shape: f32[1,128], index: 2, kind: input, shape index: {}]
  %s3 = inlined_call_operand.hbm [shape: bf16[128,128], index: 3, kind: input, shape index: {}]
  %s4 = inlined_call_operand.vmem [shape: f32[1,128], index: 4, kind: input, shape index: {}]
  %s5 = inlined_call_operand.hbm [shape: bf16[128,128], index: 5, kind: input, shape index: {}]
  %s6 = inlined_call_operand.vmem [shape: f32[1,128], index: 6, kind: input, shape index: {}]
  %s7 = inlined_call_operand.hbm [shape: bf16[16,128], index: 7, kind: output, shape index: {}]
  %s8 = sld [smem:[#allocation0]]
  $region54: #{tpu_custom_call.1} parent=0
    _
  %s10 = ssub.s32 1, %s8
  %s11 = scalar_select 0, %s10, %s8
  $region1: #{tpu_custom_call.1} parent=0
    #allocation2 [shape = 'u8[4096]{0}', space=vmem, size = 0x1000, scoped, tag = 'input window, operand 0, single buffered']
    #allocation3 [shape = 's32[1]{0}', space=sflag, size = 0x4, scoped, tag = 'scoped memory for tpu_custom_call.1']
    #allocation4 [shape = 's32[1]{0}', space=sflag, size = 0x4, scoped, tag = 'scoped memory for tpu_custom_call.1']
    #allocation5 [shape = 'u8[32768]{0}', space=vmem, size = 0x8000, scoped, tag = 'input window, operand 1, single buffered']
    #allocation6 [shape = 's32[1]{0}', space=sflag, size = 0x4, scoped, tag = 'scoped memory for tpu_custom_call.1']
    #allocation7 [shape = 'u8[32768]{0}', space=vmem, size = 0x8000, scoped, tag = 'input window, operand 3, single buffered']
    #allocation8 [shape = 'u8[32768]{0}', space=vmem, size = 0x8000, scoped, tag = 'input window, operand 5, single buffered']
    #allocation9 [shape = 's32[1]{0}', space=sflag, size = 0x4, scoped, tag = 'scoped memory for tpu_custom_call.1']
    #allocation10 [shape = 'u8[4096]{0}', space=vmem, size = 0x1000, scoped, tag = 'output window, operand 0, single buffered']
    %12 = vsyncpa [#allocation3], 0
    %13 = vsyncpa [#allocation6], 0
    %14 = vsyncpa [#allocation9], 0
    %15 = vsyncpa [#allocation4], 0
    // Predicated region
    $region2: #{tpu_custom_call.1} parent=1 // pred_check
      _
    $region3: #{tpu_custom_call.1} parent=1 // pred_check_branch
      %17 = sbr.rel (0) target = $region5
    $region4: #{tpu_custom_call.1} parent=1 // pred_region
      %19 = vsyncadd [#allocation3], 0
      %s20 = sshll.u32 %s0, 4
      %s21 = int_to_ptr.hbm [resolvable:$true] %s20
      %s22 = sshll.u32 [#allocation2], 4
      %s23 = int_to_ptr.vmem [resolvable:$true] %s22
      %28 = dma.hbm_to_vmem [thread:$0]  %s21, 128, %s23, [#allocation3], 64, 64, 4
    $region5: #{tpu_custom_call.1} parent=1 // pred_fallthru
      _
    // Predicated region
    $region6: #{tpu_custom_call.1} parent=1 // pred_check
      _
    $region7: #{tpu_custom_call.1} parent=1 // pred_check_branch
      %30 = sbr.rel (0) target = $region9
    $region8: #{tpu_custom_call.1} parent=1 // pred_region
      %32 = vsyncadd [#allocation6], 0
      %s33 = sshll.u32 %s1, 4
      %s34 = int_to_ptr.hbm [resolvable:$true] %s33
      %s35 = sshll.u32 [#allocation5], 4
      %s36 = int_to_ptr.vmem [resolvable:$true] %s35
      %41 = dma.hbm_to_vmem [thread:$0]  %s34, 1024, %s36, [#allocation6], 64, 64, 4
    $region9: #{tpu_custom_call.1} parent=1 // pred_fallthru
      _
    // Predicated region
    $region10: #{tpu_custom_call.1} parent=1 // pred_check
      _
    $region11: #{tpu_custom_call.1} parent=1 // pred_check_branch
      %43 = sbr.rel (0) target = $region13
    $region12: #{tpu_custom_call.1} parent=1 // pred_region
      _
    $region13: #{tpu_custom_call.1} parent=1 // pred_fallthru
      _
    // Predicated region
    $region14: #{tpu_custom_call.1} parent=1 // pred_check
      _
    $region15: #{tpu_custom_call.1} parent=1 // pred_check_branch
      %45 = sbr.rel (0) target = $region17
    $region16: #{tpu_custom_call.1} parent=1 // pred_region
      %47 = vsyncadd [#allocation6], 0
      %s48 = sshll.u32 %s3, 4
      %s49 = int_to_ptr.hbm [resolvable:$true] %s48
      %s50 = sshll.u32 [#allocation7], 4
      %s51 = int_to_ptr.vmem [resolvable:$true] %s50
      %56 = dma.hbm_to_vmem [thread:$0]  %s49, 1024, %s51, [#allocation6], 64, 64, 4
    $region17: #{tpu_custom_call.1} parent=1 // pred_fallthru
      _
    // Predicated region
    $region18: #{tpu_custom_call.1} parent=1 // pred_check
      _
    $region19: #{tpu_custom_call.1} parent=1 // pred_check_branch
      %58 = sbr.rel (0) target = $region21
    $region20: #{tpu_custom_call.1} parent=1 // pred_region
      _
    $region21: #{tpu_custom_call.1} parent=1 // pred_fallthru
      _
    // Predicated region
    $region22: #{tpu_custom_call.1} parent=1 // pred_check
      _
    $region23: #{tpu_custom_call.1} parent=1 // pred_check_branch
      %60 = sbr.rel (0) target = $region25
    $region24: #{tpu_custom_call.1} parent=1 // pred_region
      %62 = vsyncadd [#allocation9], 0
      %s63 = sshll.u32 %s5, 4
      %s64 = int_to_ptr.hbm [resolvable:$true] %s63
      %s65 = sshll.u32 [#allocation8], 4
      %s66 = int_to_ptr.vmem [resolvable:$true] %s65
      %71 = dma.hbm_to_vmem [thread:$0]  %s64, 1024, %s66, [#allocation9], 64, 64, 4
    $region25: #{tpu_custom_call.1} parent=1 // pred_fallthru
      _
    // Predicated region
    $region26: #{tpu_custom_call.1} parent=1 // pred_check
      _
    $region27: #{tpu_custom_call.1} parent=1 // pred_check_branch
      %73 = sbr.rel (0) target = $region29
    $region28: #{tpu_custom_call.1} parent=1 // pred_region
      _
    $region29: #{tpu_custom_call.1} parent=1 // pred_fallthru
      _
    // Predicated region
    $region30: #{tpu_custom_call.1} parent=1 // pred_check
      _
    $region31: #{tpu_custom_call.1} parent=1 // pred_check_branch
      %75 = sbr.rel (0) target = $region33
    $region32: #{tpu_custom_call.1} parent=1 // pred_region
      %77 = dma.done [#allocation3], 128
    $region33: #{tpu_custom_call.1} parent=1 // pred_fallthru
      _
    // Predicated region
    $region34: #{tpu_custom_call.1} parent=1 // pred_check
      _
    $region35: #{tpu_custom_call.1} parent=1 // pred_check_branch
      %79 = sbr.rel (0) target = $region37
    $region36: #{tpu_custom_call.1} parent=1 // pred_region
      %81 = dma.done [#allocation6], 1024
    $region37: #{tpu_custom_call.1} parent=1 // pred_fallthru
      _
    // Predicated region
    $region38: #{tpu_custom_call.1} parent=1 // pred_check
      _
    $region39: #{tpu_custom_call.1} parent=1 // pred_check_branch
      %83 = sbr.rel (0) target = $region41
    $region40: #{tpu_custom_call.1} parent=1 // pred_region
      %85 = dma.done [#allocation6], 1024
    $region41: #{tpu_custom_call.1} parent=1 // pred_fallthru
      _
    // Predicated region
    $region42: #{tpu_custom_call.1} parent=1 // pred_check
      _
    $region43: #{tpu_custom_call.1} parent=1 // pred_check_branch
      %87 = sbr.rel (0) target = $region45
    $region44: #{tpu_custom_call.1} parent=1 // pred_region
      %89 = dma.done [#allocation9], 1024
    $region45: #{tpu_custom_call.1} parent=1 // pred_fallthru
      _
    %v90 = vld [vmem:[#allocation2] sm:$0xf]
    %v91 = vld [vmem:[#allocation2 + $0x4] sm:$0xf]
    %v92 = vld [vmem:[#allocation5] sm:$0xf]
    %v93 = vld [vmem:[#allocation5 + $0x4] sm:$0xf]
    %v94 = vld [vmem:[#allocation5 + $0x8] sm:$0xf]
    %v95 = vld [vmem:[#allocation5 + $0xc] sm:$0xf]
    %v96 = vld [vmem:[#allocation5 + $0x10] sm:$0xf]
    %v97 = vld [vmem:[#allocation5 + $0x14] sm:$0xf]
    %v98 = vld [vmem:[#allocation5 + $0x18] sm:$0xf]
    %v99 = vld [vmem:[#allocation5 + $0x1c] sm:$0xf]
    %v100 = vld [vmem:[#allocation5 + $0x20] sm:$0xf]
    %v101 = vld [vmem:[#allocation5 + $0x24] sm:$0xf]
    %v102 = vld [vmem:[#allocation5 + $0x28] sm:$0xf]
    %v103 = vld [vmem:[#allocation5 + $0x2c] sm:$0xf]
    %v104 = vld [vmem:[#allocation5 + $0x30] sm:$0xf]
    %v105 = vld [vmem:[#allocation5 + $0x34] sm:$0xf]
    %v106 = vld [vmem:[#allocation5 + $0x38] sm:$0xf]
    %v107 = vld [vmem:[#allocation5 + $0x3c] sm:$0xf]
    %v108 = vld [vmem:[%s2] sm:$0x1]
    %v110 = vperm.slane %v108, 0
    %v114 = vunpack.c.l.b16 %v90
    %v115 = vunpack.c.l.b16 %v91
    %v116 = vpack.c.b16 %v115, %v114
    %v134 = vunpack.c.l.b16 %v92
    %v135 = vunpack.c.l.b16 %v93
    %v136 = vunpack.c.l.b16 %v94
    %v137 = vunpack.c.l.b16 %v95
    %v138 = vunpack.c.l.b16 %v96
    %v139 = vunpack.c.l.b16 %v97
    %v140 = vunpack.c.l.b16 %v98
    %v141 = vunpack.c.l.b16 %v99
    %v142 = vunpack.c.l.b16 %v100
    %v143 = vunpack.c.l.b16 %v101
    %v144 = vunpack.c.l.b16 %v102
    %v145 = vunpack.c.l.b16 %v103
    %v146 = vunpack.c.l.b16 %v104
    %v147 = vunpack.c.l.b16 %v105
    %v148 = vunpack.c.l.b16 %v106
    %v149 = vunpack.c.l.b16 %v107
    %v150 = vpack.c.b16 %v135, %v134
    %v151 = vpack.c.b16 %v137, %v136
    %v152 = vpack.c.b16 %v139, %v138
    %v153 = vpack.c.b16 %v141, %v140
    %v154 = vpack.c.b16 %v143, %v142
    %v155 = vpack.c.b16 %v145, %v144
    %v156 = vpack.c.b16 %v147, %v146
    %v157 = vpack.c.b16 %v149, %v148
    %166 = vmatpush.bf16.msra.mxu0 %v157
    %167 = vmatpush.bf16.msra.mxu0 %v156
    %168 = vmatpush.bf16.msra.mxu0 %v155
    %169 = vmatpush.bf16.msra.mxu0 %v154
    %170 = vmatpush.bf16.msra.mxu0 %v153
    %171 = vmatpush.bf16.msra.mxu0 %v152
    %172 = vmatpush.bf16.msra.mxu0 %v151
    %173 = vmatpush.bf16.msra.mxu0 %v150
    %174 = vmatmul.bf16.gmra.mxu0 %v116
    %v175 = vpop.f32.mrf.mxu0
    %v176 = vadd.f32 %v110, %v175
    %v177 = vpop.f32.mrf.mxu0
    %v178 = vadd.f32 %v110, %v177
    %179 = vdwg.mxu0
    %v180 = vmax.f32 %v176, 0.0
    %v181 = vmax.f32 %v178, 0.0
    %v182 = vpack.c.bf16 %v181, %v180
    %v183 = vld [vmem:[#allocation7] sm:$0xf]
    %v184 = vld [vmem:[#allocation7 + $0x4] sm:$0xf]
    %v185 = vld [vmem:[#allocation7 + $0x8] sm:$0xf]
    %v186 = vld [vmem:[#allocation7 + $0xc] sm:$0xf]
    %v187 = vld [vmem:[#allocation7 + $0x10] sm:$0xf]
    %v188 = vld [vmem:[#allocation7 + $0x14] sm:$0xf]
    %v189 = vld [vmem:[#allocation7 + $0x18] sm:$0xf]
    %v190 = vld [vmem:[#allocation7 + $0x1c] sm:$0xf]
    %v191 = vld [vmem:[#allocation7 + $0x20] sm:$0xf]
    %v192 = vld [vmem:[#allocation7 + $0x24] sm:$0xf]
    %v193 = vld [vmem:[#allocation7 + $0x28] sm:$0xf]
    %v194 = vld [vmem:[#allocation7 + $0x2c] sm:$0xf]
    %v195 = vld [vmem:[#allocation7 + $0x30] sm:$0xf]
    %v196 = vld [vmem:[#allocation7 + $0x34] sm:$0xf]
    %v197 = vld [vmem:[#allocation7 + $0x38] sm:$0xf]
    %v198 = vld [vmem:[#allocation7 + $0x3c] sm:$0xf]
    %v199 = vld [vmem:[%s4] sm:$0x1]
    %v201 = vperm.slane %v199, 0
    %v219 = vunpack.c.l.b16 %v183
    %v220 = vunpack.c.l.b16 %v184
    %v221 = vunpack.c.l.b16 %v185
    %v222 = vunpack.c.l.b16 %v186
    %v223 = vunpack.c.l.b16 %v187
    %v224 = vunpack.c.l.b16 %v188
    %v225 = vunpack.c.l.b16 %v189
    %v226 = vunpack.c.l.b16 %v190
    %v227 = vunpack.c.l.b16 %v191
    %v228 = vunpack.c.l.b16 %v192
    %v229 = vunpack.c.l.b16 %v193
    %v230 = vunpack.c.l.b16 %v194
    %v231 = vunpack.c.l.b16 %v195
    %v232 = vunpack.c.l.b16 %v196
    %v233 = vunpack.c.l.b16 %v197
    %v234 = vunpack.c.l.b16 %v198
    %v235 = vpack.c.b16 %v220, %v219
    %v236 = vpack.c.b16 %v222, %v221
    %v237 = vpack.c.b16 %v224, %v223
    %v238 = vpack.c.b16 %v226, %v225
    %v239 = vpack.c.b16 %v228, %v227
    %v240 = vpack.c.b16 %v230, %v229
    %v241 = vpack.c.b16 %v232, %v231
    %v242 = vpack.c.b16 %v234, %v233
    %251 = vmatpush.bf16.msra.mxu0 %v242
    %252 = vmatpush.bf16.msra.mxu0 %v241
    %253 = vmatpush.bf16.msra.mxu0 %v240
    %254 = vmatpush.bf16.msra.mxu0 %v239
    %255 = vmatpush.bf16.msra.mxu0 %v238
    %256 = vmatpush.bf16.msra.mxu0 %v237
    %257 = vmatpush.bf16.msra.mxu0 %v236
    %258 = vmatpush.bf16.msra.mxu0 %v235
    %259 = vmatmul.bf16.gmra.mxu0 %v182
    %v260 = vpop.f32.mrf.mxu0
    %v261 = vadd.f32 %v201, %v260
    %v262 = vpop.f32.mrf.mxu0
    %v263 = vadd.f32 %v201, %v262
    %264 = vdwg.mxu0
    %v265 = vmax.f32 %v261, 0.0
    %v266 = vmax.f32 %v263, 0.0
    %v267 = vpack.c.bf16 %v266, %v265
    %v268 = vld [vmem:[#allocation8] sm:$0xf]
    %v269 = vld [vmem:[#allocation8 + $0x4] sm:$0xf]
    %v270 = vld [vmem:[#allocation8 + $0x8] sm:$0xf]
    %v271 = vld [vmem:[#allocation8 + $0xc] sm:$0xf]
    %v272 = vld [vmem:[#allocation8 + $0x10] sm:$0xf]
    %v273 = vld [vmem:[#allocation8 + $0x14] sm:$0xf]
    %v274 = vld [vmem:[#allocation8 + $0x18] sm:$0xf]
    %v275 = vld [vmem:[#allocation8 + $0x1c] sm:$0xf]
    %v276 = vld [vmem:[#allocation8 + $0x20] sm:$0xf]
    %v277 = vld [vmem:[#allocation8 + $0x24] sm:$0xf]
    %v278 = vld [vmem:[#allocation8 + $0x28] sm:$0xf]
    %v279 = vld [vmem:[#allocation8 + $0x2c] sm:$0xf]
    %v280 = vld [vmem:[#allocation8 + $0x30] sm:$0xf]
    %v281 = vld [vmem:[#allocation8 + $0x34] sm:$0xf]
    %v282 = vld [vmem:[#allocation8 + $0x38] sm:$0xf]
    %v283 = vld [vmem:[#allocation8 + $0x3c] sm:$0xf]
    %v284 = vld [vmem:[%s6] sm:$0x1]
    %v286 = vperm.slane %v284, 0
    %v304 = vunpack.c.l.b16 %v268
    %v305 = vunpack.c.l.b16 %v269
    %v306 = vunpack.c.l.b16 %v270
    %v307 = vunpack.c.l.b16 %v271
    %v308 = vunpack.c.l.b16 %v272
    %v309 = vunpack.c.l.b16 %v273
    %v310 = vunpack.c.l.b16 %v274
    %v311 = vunpack.c.l.b16 %v275
    %v312 = vunpack.c.l.b16 %v276
    %v313 = vunpack.c.l.b16 %v277
    %v314 = vunpack.c.l.b16 %v278
    %v315 = vunpack.c.l.b16 %v279
    %v316 = vunpack.c.l.b16 %v280
    %v317 = vunpack.c.l.b16 %v281
    %v318 = vunpack.c.l.b16 %v282
    %v319 = vunpack.c.l.b16 %v283
    %v320 = vpack.c.b16 %v305, %v304
    %v321 = vpack.c.b16 %v307, %v306
    %v322 = vpack.c.b16 %v309, %v308
    %v323 = vpack.c.b16 %v311, %v310
    %v324 = vpack.c.b16 %v313, %v312
    %v325 = vpack.c.b16 %v315, %v314
    %v326 = vpack.c.b16 %v317, %v316
    %v327 = vpack.c.b16 %v319, %v318
    %336 = vmatpush.bf16.msra.mxu0 %v327
    %337 = vmatpush.bf16.msra.mxu0 %v326
    %338 = vmatpush.bf16.msra.mxu0 %v325
    %339 = vmatpush.bf16.msra.mxu0 %v324
    %340 = vmatpush.bf16.msra.mxu0 %v323
    %341 = vmatpush.bf16.msra.mxu0 %v322
    %342 = vmatpush.bf16.msra.mxu0 %v321
    %343 = vmatpush.bf16.msra.mxu0 %v320
    %344 = vmatmul.bf16.gmra.mxu0 %v267
    %v345 = vpop.f32.mrf.mxu0
    %v346 = vadd.f32 %v286, %v345
    %v347 = vpop.f32.mrf.mxu0
    %v348 = vadd.f32 %v286, %v347
    %349 = vdwg.mxu0
    %v350 = vpack.c.bf16 %v346, %v346
    %v351 = vpack.c.bf16 %v348, %v348
    %352 = vst [vmem:[#allocation10] sm:$0xf] %v350
    %353 = vst [vmem:[#allocation10 + $0x4] sm:$0xf] %v351
    // Predicated region
    $region46: #{tpu_custom_call.1} parent=1 // pred_check
      _
    $region47: #{tpu_custom_call.1} parent=1 // pred_check_branch
      %355 = sbr.rel (0) target = $region49
    $region48: #{tpu_custom_call.1} parent=1 // pred_region
      %357 = vsyncadd [#allocation4], 0
      %s358 = sshll.u32 [#allocation10], 4
      %s359 = int_to_ptr.vmem [resolvable:$true] %s358
      %s360 = sshll.u32 %s7, 4
      %s361 = int_to_ptr.hbm [resolvable:$true] %s360
      %366 = dma.vmem_to_hbm [thread:$0]  %s359, 128, %s361, [#allocation4], 64, 64, 4
    $region49: #{tpu_custom_call.1} parent=1 // pred_fallthru
      _
    // Predicated region
    $region50: #{tpu_custom_call.1} parent=1 // pred_check
      _
    $region51: #{tpu_custom_call.1} parent=1 // pred_check_branch
      %368 = sbr.rel (0) target = $region53
    $region52: #{tpu_custom_call.1} parent=1 // pred_region
      %370 = dma.done [#allocation4], 128
    $region53: #{tpu_custom_call.1} parent=1 // pred_fallthru
      _
    %371 = vsyncpa [#allocation3], 1
    %372 = vsyncpa [#allocation6], 1
    %373 = vsyncpa [#allocation9], 1
    %374 = vsyncpa [#allocation4], 1

</llo_original>
